<compile_context>
chip_gen: v7x
topology: tpu7x:2x2x1
jax: 0.10.0
libtpu: 0.0.40
codegen_flags: <defaults>
</compile_context>

<pallas_src>
import functools

import jax
import jax.numpy as jnp
from jax.experimental import pallas as pl
from jax.experimental.pallas import tpu as pltpu

LEAKY_SLOPE = 0.01
BN_EPS = 1e-5


def _resblock_kernel(x_ref, w1_ref, w2_ref, rows_ref, out_ref, *, H, W, Cout):
    """Whole ResBlock forward on lane-dense (N*H, W*C) slabs, VMEM resident."""
    NH = x_ref.shape[0]
    WCout = W * Cout
    inv_m = 1.0 / float(NH * W)            # 1 / (N*H*W) for the batch stats
    mdt = w1_ref.dtype                     # matmul operand dtype (bf16 or f32)

    # Row index within each image (h); shared by both halo masks.
    h_idx = jax.lax.broadcasted_iota(jnp.int32, (NH, 1), 0) % H
    top = h_idx == 0
    bot = h_idx == H - 1

    def lrelu(v):
        return jnp.where(v > 0, v, LEAKY_SLOPE * v)

    def shift_rows(slab, direction):
        # direction=+1: row (n,h) receives row (n,h-1), zeroed at h == 0
        # direction=-1: row (n,h) receives row (n,h+1), zeroed at h == H-1
        rolled = pltpu.roll(slab, shift=direction % NH, axis=0)  # sublane roll
        return jnp.where(top if direction == 1 else bot, 0.0, rolled)

    def group_sum(row):
        # Per-channel sum over the W lane-groups, result already broadcast
        # back to every (w, c) lane: log2(W) lane roll-and-add steps (XLU),
        # no channel-selector matmul / operand.
        shift = Cout
        while shift < WCout:
            row = row + pltpu.roll(row, shift=shift, axis=1)
            shift *= 2
        return row

    def batchnorm(v, g_row, be_row):
        mean = group_sum(jnp.sum(v, axis=0, keepdims=True)) * inv_m
        ex2 = group_sum(jnp.sum(v * v, axis=0, keepdims=True)) * inv_m
        var = ex2 - mean * mean            # one-pass stats (fine in f32 here)
        scale = jax.lax.rsqrt(var + BN_EPS) * g_row
        return (v - mean) * scale + be_row

    x = x_ref[...]                          # (NH, W*Cin) f32
    rows = rows_ref[...]                    # (6, W*Cout) f32 per-channel rows
    b1, g1, be1 = rows[0:1], rows[1:2], rows[2:3]
    b2, g2, be2 = rows[3:4], rows[4:5], rows[5:6]

    # ---- conv1 (+bias): one fused contraction over (vertical tap, w, cin) --
    lhs1 = jnp.concatenate([shift_rows(x, +1), x, shift_rows(x, -1)], axis=1)
    fx = jnp.dot(lhs1.astype(mdt), w1_ref[...],
                 preferred_element_type=jnp.float32) + b1

    # ---- bn1 + LeakyReLU (all f32 elementwise) ----
    fx = lrelu(batchnorm(fx, g1, be1))

    # ---- conv2 (+bias) + residual: one fused contraction; the residual
    # embedding onto the first Cin channels is folded into the tail of w2 ----
    lhs2 = jnp.concatenate(
        [shift_rows(fx, +1), fx, shift_rows(fx, -1), x], axis=1)
    fx2 = jnp.dot(lhs2.astype(mdt), w2_ref[...],
                  preferred_element_type=jnp.float32) + b2

    # ---- LeakyReLU + bn2, lane-dense (NH, W*Cout) store ----
    out_ref[...] = batchnorm(lrelu(fx2), g2, be2)


def _band_weights(w_hwio, W, pad):
    """Fold the horizontal taps + W zero-padding of a KxK conv into K band
    matrices of shape (W*Cin, W*Cout), one per vertical tap dh."""
    K, Kw, Ci, Co = w_hwio.shape
    w_hwio = w_hwio.astype(jnp.float32)
    wpos = jnp.arange(W)
    mats = []
    for dh in range(K):
        m = jnp.zeros((W * Ci, W * Co), jnp.float32)
        for dw in range(Kw):
            src = wpos + dw - pad                       # source w per output w
            valid = (src >= 0) & (src < W)
            sel = ((src[None, :] == wpos[:, None]) & valid[None, :])
            sel = sel.astype(jnp.float32)               # (W_src, W_out)
            m = m + jnp.einsum('st,io->sito', sel,
                               w_hwio[dh, dw]).reshape(W * Ci, W * Co)
        mats.append(m)
    return jnp.stack(mats, axis=0)                      # (K, W*Ci, W*Co)


def prepare_resblock_constants(params, W, kernel_size=3,
                               matmul_dtype=jnp.bfloat16):
    """Per-layer parameter preprocessing. Call ONCE per layer (at parameter
    load / update time), not per forward — these are constants of the layer."""
    w1, b1, g1, be1, w2, b2, g2, be2 = params
    assert kernel_size == 3, "ResBlock Pallas kernel supports kernel_size=3"
    K = kernel_size
    Cin, Cout = w1.shape[2], w1.shape[3]

    band1 = _band_weights(w1, W, pad=K - 2)             # (K, W*Cin,  W*Cout)
    band2 = _band_weights(w2, W, pad=1)                 # (K, W*Cout, W*Cout)
    # Residual embedding: first Cin channels of every w block (folded into w2).
    emat = jnp.einsum('ab,cd->acbd',
                      jnp.eye(W, dtype=jnp.float32),
                      jnp.eye(Cin, Cout, dtype=jnp.float32)
                      ).reshape(W * Cin, W * Cout)

    w1cat = band1.reshape(K * W * Cin, W * Cout).astype(matmul_dtype)
    w2cat = jnp.concatenate(
        [band2.reshape(K * W * Cout, W * Cout), emat],
        axis=0).astype(matmul_dtype)                    # (3*W*Cout + W*Cin, W*Cout)

    def row(v):                                         # channel-minor lane row
        return jnp.tile(v.astype(jnp.float32), W)       # (W*Cout,)

    rows = jnp.stack([row(b1), row(g1), row(be1),
                      row(b2), row(g2), row(be2)], axis=0)   # (6, W*Cout)
    return w1cat, w2cat, rows


@jax.jit
def resblock_pallas(x_nchw, w1cat, w2cat, rows):
    N, Cin, H, W = x_nchw.shape
    WCout = rows.shape[1]
    Cout = WCout // W
    assert W > 0 and (W & (W - 1)) == 0, "W must be a power of two (BN roll tree)"

    # NCHW -> lane-dense (N*H, W*Cin) slab (w-major, channel minor on lanes).
    x_flat = jnp.transpose(x_nchw, (0, 2, 3, 1)).astype(jnp.float32)
    x_flat = x_flat.reshape(N * H, W * Cin)

    kern = functools.partial(_resblock_kernel, H=H, W=W, Cout=Cout)
    vmem = pl.BlockSpec(memory_space=pltpu.MemorySpace.VMEM)

    out_flat = pl.pallas_call(
        kern,
        out_shape=jax.ShapeDtypeStruct((N * H, WCout), jnp.float32),
        in_specs=[vmem] * 4,
        out_specs=vmem,
    )(x_flat, w1cat, w2cat, rows)

    out = out_flat.reshape(N, H, W, Cout)
    return jnp.transpose(out, (0, 3, 1, 2))


def resblock_ref(x_nchw, params):
    """Plain-JAX reference mirroring the PyTorch module (training-mode BN)."""
    w1, b1, g1, be1, w2, b2, g2, be2 = params

    def conv(x, w, b, pad):
        y = jax.lax.conv_general_dilated(
            x, w, window_strides=(1, 1), padding=[(pad, pad), (pad, pad)],
            dimension_numbers=('NCHW', 'HWIO', 'NCHW'))
        return y + b.reshape(1, -1, 1, 1)

    def bn(x, g, be):
        mean = jnp.mean(x, axis=(0, 2, 3), keepdims=True)
        var = jnp.mean((x - mean) ** 2, axis=(0, 2, 3), keepdims=True)
        return ((x - mean) * jax.lax.rsqrt(var + BN_EPS)
                * g.reshape(1, -1, 1, 1) + be.reshape(1, -1, 1, 1))

    def lrelu(x):
        return jnp.where(x > 0, x, LEAKY_SLOPE * x)

    Cin = x_nchw.shape[1]
    fx = lrelu(bn(conv(x_nchw, w1, b1, 1), g1, be1))
    fx = conv(fx, w2, b2, 1)
    fx = fx.at[:, :Cin].add(x_nchw)
    return bn(lrelu(fx), g2, be2)


if __name__ == "__main__":
    N, Cin, Cout, H, W, K = 2, 4, 8, 16, 16, 3

    key = jax.random.PRNGKey(0)
    ks = jax.random.split(key, 9)
    x = jax.random.normal(ks[0], (N, Cin, H, W), jnp.float32)
    w1 = 0.1 * jax.random.normal(ks[1], (K, K, Cin, Cout), jnp.float32)
    b1 = 0.1 * jax.random.normal(ks[2], (Cout,), jnp.float32)
    g1 = 1.0 + 0.1 * jax.random.normal(ks[3], (Cout,), jnp.float32)
    be1 = 0.1 * jax.random.normal(ks[4], (Cout,), jnp.float32)
    w2 = 0.1 * jax.random.normal(ks[5], (K, K, Cout, Cout), jnp.float32)
    b2 = 0.1 * jax.random.normal(ks[6], (Cout,), jnp.float32)
    g2 = 1.0 + 0.1 * jax.random.normal(ks[7], (Cout,), jnp.float32)
    be2 = 0.1 * jax.random.normal(ks[8], (Cout,), jnp.float32)
    params = (w1, b1, g1, be1, w2, b2, g2, be2)

    ref = resblock_ref(x, params)

    # f32-weight path: tight numerical check against the plain-JAX reference.
    consts_f32 = prepare_resblock_constants(params, W, K,
                                            matmul_dtype=jnp.float32)
    out_f32 = jax.block_until_ready(resblock_pallas(x, *consts_f32))
    assert out_f32.shape == (N, Cout, H, W)
    err_f32 = float(jnp.max(jnp.abs(out_f32 - ref)))
    if not err_f32 < 1e-3:
        raise AssertionError(f"f32 path mismatch: max abs err = {err_f32}")

    # bf16-weight path (production): MXU-native, half the constant DMA.
    consts_bf16 = prepare_resblock_constants(params, W, K,
                                             matmul_dtype=jnp.bfloat16)
    out_bf16 = jax.block_until_ready(resblock_pallas(x, *consts_bf16))
    assert out_bf16.shape == (N, Cout, H, W)
    err_bf16 = float(jnp.max(jnp.abs(out_bf16 - ref)))
    if not err_bf16 < 5e-2:
        raise AssertionError(f"bf16 path mismatch: max abs err = {err_bf16}")

    print("KERNEL_OK")
</pallas_src>

<mosaic_0001>
module attributes {stable_mosaic.version = 11 : i64} {
  func.func @_resblock_kernel(%arg0: memref<32x64xf32, #tpu.memory_space<vmem>>, %arg1: memref<192x128xf32, #tpu.memory_space<vmem>>, %arg2: memref<448x128xf32, #tpu.memory_space<vmem>>, %arg3: memref<6x128xf32, #tpu.memory_space<vmem>>, %arg4: memref<32x128xf32, #tpu.memory_space<vmem>>) attributes {dimension_semantics = [], scalar_prefetch = 0 : i64, scratch_operands = 0 : i64, tpu.core_type = #tpu.core_type<tc>} {
    %0 = tpu.iota {dimensions = array<i32: 0>} : vector<32x1xi32>
    %c16_i32 = arith.constant 16 : i32
    %c0_i32 = arith.constant 0 : i32
    %1 = arith.cmpi eq, %c16_i32, %c0_i32 : i32
    %c1_i32 = arith.constant 1 : i32
    %2 = arith.select %1, %c1_i32, %c16_i32 : i32
    %3 = vector.broadcast %2 : i32 to vector<32x1xi32>
    %4 = arith.remsi %0, %3 : vector<32x1xi32>
    %c0_i32_0 = arith.constant 0 : i32
    %5 = vector.broadcast %c0_i32_0 : i32 to vector<32x1xi32>
    %6 = arith.cmpi ne, %4, %5 : vector<32x1xi32>
    %c0_i32_1 = arith.constant 0 : i32
    %7 = vector.broadcast %c0_i32_1 : i32 to vector<32x1xi32>
    %8 = arith.cmpi slt, %4, %7 : vector<32x1xi32>
    %c0_i32_2 = arith.constant 0 : i32
    %9 = arith.cmpi slt, %2, %c0_i32_2 : i32
    %10 = vector.broadcast %9 : i1 to vector<32x1xi1>
    %11 = vector.broadcast %10 : vector<32x1xi1> to vector<32x1xi1>
    %12 = arith.xori %8, %11 : vector<32x1xi1>
    %13 = arith.andi %12, %6 : vector<32x1xi1>
    %14 = vector.broadcast %2 : i32 to vector<32x1xi32>
    %15 = arith.addi %4, %14 : vector<32x1xi32>
    %16 = arith.select %13, %15, %4 : vector<32x1xi1>, vector<32x1xi32>
    %c0_i32_3 = arith.constant 0 : i32
    %17 = vector.broadcast %c0_i32_3 : i32 to vector<32x1xi32>
    %18 = arith.cmpi eq, %16, %17 : vector<32x1xi32>
    %c15_i32 = arith.constant 15 : i32
    %19 = vector.broadcast %c15_i32 : i32 to vector<32x1xi32>
    %20 = arith.cmpi eq, %16, %19 : vector<32x1xi32>
    %c0 = arith.constant 0 : index
    %c0_4 = arith.constant 0 : index
    %21 = vector.load %arg0[%c0, %c0_4] : memref<32x64xf32, #tpu.memory_space<vmem>>, vector<32x64xf32>
    %c0_5 = arith.constant 0 : index
    %c0_6 = arith.constant 0 : index
    %22 = vector.load %arg3[%c0_5, %c0_6] : memref<6x128xf32, #tpu.memory_space<vmem>>, vector<6x128xf32>
    %23 = vector.extract_strided_slice %22 {offsets = [0, 0], sizes = [1, 128], strides = [1, 1]} : vector<6x128xf32> to vector<1x128xf32>
    %24 = vector.extract_strided_slice %22 {offsets = [1, 0], sizes = [1, 128], strides = [1, 1]} : vector<6x128xf32> to vector<1x128xf32>
    %25 = vector.extract_strided_slice %22 {offsets = [2, 0], sizes = [1, 128], strides = [1, 1]} : vector<6x128xf32> to vector<1x128xf32>
    %26 = vector.extract_strided_slice %22 {offsets = [3, 0], sizes = [1, 128], strides = [1, 1]} : vector<6x128xf32> to vector<1x128xf32>
    %27 = vector.extract_strided_slice %22 {offsets = [4, 0], sizes = [1, 128], strides = [1, 1]} : vector<6x128xf32> to vector<1x128xf32>
    %28 = vector.extract_strided_slice %22 {offsets = [5, 0], sizes = [1, 128], strides = [1, 1]} : vector<6x128xf32> to vector<1x128xf32>
    %c1_i32_7 = arith.constant 1 : i32
    %29 = tpu.dynamic_rotate %21 by %c1_i32_7 dim 0 : vector<32x64xf32>, i32 -> vector<32x64xf32>
    %cst = arith.constant 0.000000e+00 : f32
    %30 = vector.shape_cast %18 : vector<32x1xi1> to vector<32x1xi1>
    %31 = vector.broadcast %30 : vector<32x1xi1> to vector<32x64xi1>
    %32 = vector.broadcast %cst : f32 to vector<32x64xf32>
    %33 = arith.select %31, %32, %29 : vector<32x64xi1>, vector<32x64xf32>
    %c31_i32 = arith.constant 31 : i32
    %34 = tpu.dynamic_rotate %21 by %c31_i32 dim 0 : vector<32x64xf32>, i32 -> vector<32x64xf32>
    %cst_8 = arith.constant 0.000000e+00 : f32
    %35 = vector.shape_cast %20 : vector<32x1xi1> to vector<32x1xi1>
    %36 = vector.broadcast %35 : vector<32x1xi1> to vector<32x64xi1>
    %37 = vector.broadcast %cst_8 : f32 to vector<32x64xf32>
    %38 = arith.select %36, %37, %34 : vector<32x64xi1>, vector<32x64xf32>
    %39 = tpu.concatenate %33, %21, %38 in 1 : vector<32x64xf32>, vector<32x64xf32>, vector<32x64xf32> -> vector<32x192xf32>
    %c0_9 = arith.constant 0 : index
    %c0_10 = arith.constant 0 : index
    %40 = vector.load %arg1[%c0_9, %c0_10] : memref<192x128xf32, #tpu.memory_space<vmem>>, vector<192x128xf32>
    %cst_11 = arith.constant dense<0.000000e+00> : vector<32x128xf32>
    %41 = tpu.matmul %39, %40, %cst_11 {dimension_numbers = #tpu.dot_dimension_numbers<[1], [0], [0], [1], [0, 0, 1, 1], [], []>} : vector<32x192xf32>, vector<192x128xf32>, vector<32x128xf32> -> vector<32x128xf32>
    %42 = vector.broadcast %23 : vector<1x128xf32> to vector<32x128xf32>
    %43 = arith.addf %41, %42 : vector<32x128xf32>
    %cst_12 = arith.constant dense<0.000000e+00> : vector<128xf32>
    %44 = vector.multi_reduction <add>, %43, %cst_12 [0] : vector<32x128xf32> to vector<128xf32>
    %45 = vector.shape_cast %44 : vector<128xf32> to vector<1x128xf32>
    %c8_i32 = arith.constant 8 : i32
    %46 = tpu.dynamic_rotate %45 by %c8_i32 dim 1 : vector<1x128xf32>, i32 -> vector<1x128xf32>
    %47 = arith.addf %45, %46 : vector<1x128xf32>
    %c16_i32_13 = arith.constant 16 : i32
    %48 = tpu.dynamic_rotate %47 by %c16_i32_13 dim 1 : vector<1x128xf32>, i32 -> vector<1x128xf32>
    %49 = arith.addf %47, %48 : vector<1x128xf32>
    %c32_i32 = arith.constant 32 : i32
    %50 = tpu.dynamic_rotate %49 by %c32_i32 dim 1 : vector<1x128xf32>, i32 -> vector<1x128xf32>
    %51 = arith.addf %49, %50 : vector<1x128xf32>
    %c64_i32 = arith.constant 64 : i32
    %52 = tpu.dynamic_rotate %51 by %c64_i32 dim 1 : vector<1x128xf32>, i32 -> vector<1x128xf32>
    %53 = arith.addf %51, %52 : vector<1x128xf32>
    %cst_14 = arith.constant 0.001953125 : f32
    %54 = vector.broadcast %cst_14 : f32 to vector<1x128xf32>
    %55 = arith.mulf %53, %54 : vector<1x128xf32>
    %56 = arith.mulf %43, %43 : vector<32x128xf32>
    %cst_15 = arith.constant dense<0.000000e+00> : vector<128xf32>
    %57 = vector.multi_reduction <add>, %56, %cst_15 [0] : vector<32x128xf32> to vector<128xf32>
    %58 = vector.shape_cast %57 : vector<128xf32> to vector<1x128xf32>
    %c8_i32_16 = arith.constant 8 : i32
    %59 = tpu.dynamic_rotate %58 by %c8_i32_16 dim 1 : vector<1x128xf32>, i32 -> vector<1x128xf32>
    %60 = arith.addf %58, %59 : vector<1x128xf32>
    %c16_i32_17 = arith.constant 16 : i32
    %61 = tpu.dynamic_rotate %60 by %c16_i32_17 dim 1 : vector<1x128xf32>, i32 -> vector<1x128xf32>
    %62 = arith.addf %60, %61 : vector<1x128xf32>
    %c32_i32_18 = arith.constant 32 : i32
    %63 = tpu.dynamic_rotate %62 by %c32_i32_18 dim 1 : vector<1x128xf32>, i32 -> vector<1x128xf32>
    %64 = arith.addf %62, %63 : vector<1x128xf32>
    %c64_i32_19 = arith.constant 64 : i32
    %65 = tpu.dynamic_rotate %64 by %c64_i32_19 dim 1 : vector<1x128xf32>, i32 -> vector<1x128xf32>
    %66 = arith.addf %64, %65 : vector<1x128xf32>
    %cst_20 = arith.constant 0.001953125 : f32
    %67 = vector.broadcast %cst_20 : f32 to vector<1x128xf32>
    %68 = arith.mulf %66, %67 : vector<1x128xf32>
    %69 = arith.mulf %55, %55 : vector<1x128xf32>
    %70 = arith.subf %68, %69 : vector<1x128xf32>
    %cst_21 = arith.constant 9.99999974E-6 : f32
    %71 = vector.broadcast %cst_21 : f32 to vector<1x128xf32>
    %72 = arith.addf %70, %71 : vector<1x128xf32>
    %73 = math.rsqrt %72 : vector<1x128xf32>
    %74 = arith.mulf %73, %24 : vector<1x128xf32>
    %75 = vector.broadcast %55 : vector<1x128xf32> to vector<32x128xf32>
    %76 = arith.subf %43, %75 : vector<32x128xf32>
    %77 = vector.broadcast %74 : vector<1x128xf32> to vector<32x128xf32>
    %78 = arith.mulf %76, %77 : vector<32x128xf32>
    %79 = vector.broadcast %25 : vector<1x128xf32> to vector<32x128xf32>
    %80 = arith.addf %78, %79 : vector<32x128xf32>
    %cst_22 = arith.constant 0.000000e+00 : f32
    %81 = vector.broadcast %cst_22 : f32 to vector<32x128xf32>
    %82 = arith.cmpf ogt, %80, %81 : vector<32x128xf32>
    %cst_23 = arith.constant 0.00999999977 : f32
    %83 = vector.broadcast %cst_23 : f32 to vector<32x128xf32>
    %84 = arith.mulf %83, %80 : vector<32x128xf32>
    %85 = arith.select %82, %80, %84 : vector<32x128xi1>, vector<32x128xf32>
    %c1_i32_24 = arith.constant 1 : i32
    %86 = tpu.dynamic_rotate %85 by %c1_i32_24 dim 0 : vector<32x128xf32>, i32 -> vector<32x128xf32>
    %cst_25 = arith.constant 0.000000e+00 : f32
    %87 = vector.shape_cast %18 : vector<32x1xi1> to vector<32x1xi1>
    %88 = vector.broadcast %87 : vector<32x1xi1> to vector<32x128xi1>
    %89 = vector.broadcast %cst_25 : f32 to vector<32x128xf32>
    %90 = arith.select %88, %89, %86 : vector<32x128xi1>, vector<32x128xf32>
    %c31_i32_26 = arith.constant 31 : i32
    %91 = tpu.dynamic_rotate %85 by %c31_i32_26 dim 0 : vector<32x128xf32>, i32 -> vector<32x128xf32>
    %cst_27 = arith.constant 0.000000e+00 : f32
    %92 = vector.shape_cast %20 : vector<32x1xi1> to vector<32x1xi1>
    %93 = vector.broadcast %92 : vector<32x1xi1> to vector<32x128xi1>
    %94 = vector.broadcast %cst_27 : f32 to vector<32x128xf32>
    %95 = arith.select %93, %94, %91 : vector<32x128xi1>, vector<32x128xf32>
    %96 = tpu.concatenate %90, %85, %95, %21 in 1 : vector<32x128xf32>, vector<32x128xf32>, vector<32x128xf32>, vector<32x64xf32> -> vector<32x448xf32>
    %c0_28 = arith.constant 0 : index
    %c0_29 = arith.constant 0 : index
    %97 = vector.load %arg2[%c0_28, %c0_29] : memref<448x128xf32, #tpu.memory_space<vmem>>, vector<448x128xf32>
    %cst_30 = arith.constant dense<0.000000e+00> : vector<32x128xf32>
    %98 = tpu.matmul %96, %97, %cst_30 {dimension_numbers = #tpu.dot_dimension_numbers<[1], [0], [0], [1], [0, 0, 1, 1], [], []>} : vector<32x448xf32>, vector<448x128xf32>, vector<32x128xf32> -> vector<32x128xf32>
    %99 = vector.broadcast %26 : vector<1x128xf32> to vector<32x128xf32>
    %100 = arith.addf %98, %99 : vector<32x128xf32>
    %cst_31 = arith.constant 0.000000e+00 : f32
    %101 = vector.broadcast %cst_31 : f32 to vector<32x128xf32>
    %102 = arith.cmpf ogt, %100, %101 : vector<32x128xf32>
    %cst_32 = arith.constant 0.00999999977 : f32
    %103 = vector.broadcast %cst_32 : f32 to vector<32x128xf32>
    %104 = arith.mulf %103, %100 : vector<32x128xf32>
    %105 = arith.select %102, %100, %104 : vector<32x128xi1>, vector<32x128xf32>
    %cst_33 = arith.constant dense<0.000000e+00> : vector<128xf32>
    %106 = vector.multi_reduction <add>, %105, %cst_33 [0] : vector<32x128xf32> to vector<128xf32>
    %107 = vector.shape_cast %106 : vector<128xf32> to vector<1x128xf32>
    %c8_i32_34 = arith.constant 8 : i32
    %108 = tpu.dynamic_rotate %107 by %c8_i32_34 dim 1 : vector<1x128xf32>, i32 -> vector<1x128xf32>
    %109 = arith.addf %107, %108 : vector<1x128xf32>
    %c16_i32_35 = arith.constant 16 : i32
    %110 = tpu.dynamic_rotate %109 by %c16_i32_35 dim 1 : vector<1x128xf32>, i32 -> vector<1x128xf32>
    %111 = arith.addf %109, %110 : vector<1x128xf32>
    %c32_i32_36 = arith.constant 32 : i32
    %112 = tpu.dynamic_rotate %111 by %c32_i32_36 dim 1 : vector<1x128xf32>, i32 -> vector<1x128xf32>
    %113 = arith.addf %111, %112 : vector<1x128xf32>
    %c64_i32_37 = arith.constant 64 : i32
    %114 = tpu.dynamic_rotate %113 by %c64_i32_37 dim 1 : vector<1x128xf32>, i32 -> vector<1x128xf32>
    %115 = arith.addf %113, %114 : vector<1x128xf32>
    %cst_38 = arith.constant 0.001953125 : f32
    %116 = vector.broadcast %cst_38 : f32 to vector<1x128xf32>
    %117 = arith.mulf %115, %116 : vector<1x128xf32>
    %118 = arith.mulf %105, %105 : vector<32x128xf32>
    %cst_39 = arith.constant dense<0.000000e+00> : vector<128xf32>
    %119 = vector.multi_reduction <add>, %118, %cst_39 [0] : vector<32x128xf32> to vector<128xf32>
    %120 = vector.shape_cast %119 : vector<128xf32> to vector<1x128xf32>
    %c8_i32_40 = arith.constant 8 : i32
    %121 = tpu.dynamic_rotate %120 by %c8_i32_40 dim 1 : vector<1x128xf32>, i32 -> vector<1x128xf32>
    %122 = arith.addf %120, %121 : vector<1x128xf32>
    %c16_i32_41 = arith.constant 16 : i32
    %123 = tpu.dynamic_rotate %122 by %c16_i32_41 dim 1 : vector<1x128xf32>, i32 -> vector<1x128xf32>
    %124 = arith.addf %122, %123 : vector<1x128xf32>
    %c32_i32_42 = arith.constant 32 : i32
    %125 = tpu.dynamic_rotate %124 by %c32_i32_42 dim 1 : vector<1x128xf32>, i32 -> vector<1x128xf32>
    %126 = arith.addf %124, %125 : vector<1x128xf32>
    %c64_i32_43 = arith.constant 64 : i32
    %127 = tpu.dynamic_rotate %126 by %c64_i32_43 dim 1 : vector<1x128xf32>, i32 -> vector<1x128xf32>
    %128 = arith.addf %126, %127 : vector<1x128xf32>
    %cst_44 = arith.constant 0.001953125 : f32
    %129 = vector.broadcast %cst_44 : f32 to vector<1x128xf32>
    %130 = arith.mulf %128, %129 : vector<1x128xf32>
    %131 = arith.mulf %117, %117 : vector<1x128xf32>
    %132 = arith.subf %130, %131 : vector<1x128xf32>
    %cst_45 = arith.constant 9.99999974E-6 : f32
    %133 = vector.broadcast %cst_45 : f32 to vector<1x128xf32>
    %134 = arith.addf %132, %133 : vector<1x128xf32>
    %135 = math.rsqrt %134 : vector<1x128xf32>
    %136 = arith.mulf %135, %27 : vector<1x128xf32>
    %137 = vector.broadcast %117 : vector<1x128xf32> to vector<32x128xf32>
    %138 = arith.subf %105, %137 : vector<32x128xf32>
    %139 = vector.broadcast %136 : vector<1x128xf32> to vector<32x128xf32>
    %140 = arith.mulf %138, %139 : vector<32x128xf32>
    %141 = vector.broadcast %28 : vector<1x128xf32> to vector<32x128xf32>
    %142 = arith.addf %140, %141 : vector<32x128xf32>
    %c0_46 = arith.constant 0 : index
    %c0_47 = arith.constant 0 : index
    %143 = vector.load %arg4[%c0_46, %c0_47] : memref<32x128xf32, #tpu.memory_space<vmem>>, vector<32x128xf32>
    tpu.vector_store %arg4[%c0_46, %c0_47], %142 {strides = array<i32>} : memref<32x128xf32, #tpu.memory_space<vmem>>, vector<32x128xf32>,
    return
  }
}

</mosaic_0001>

<llo_original>
// kernel: resblock_pallas.1
$region0: #{resblock_pallas.1}
  #allocation0 [shape = 'u32[]', space=smem, size = 0x4, offset = 0x4, fixed_abs, tag = 'smem constant byte address 0x4 - core index']
  #allocation1 [shape = 'u32[144,128]{1,0:T(1,128)}', space=vmem, size = 0x12000, scoped, tag = 'internal scratch']
  %s0 = inlined_call_operand.vmem [shape: f32[32,64], index: 0, kind: input, shape index: {}]
  %s1 = inlined_call_operand.hbm [shape: f32[192,128], index: 1, kind: input, shape index: {}]
  %s2 = inlined_call_operand.vmem [shape: f32[448,128], index: 2, kind: input, shape index: {}]
  %s3 = inlined_call_operand.vmem [shape: f32[6,128], index: 3, kind: input, shape index: {}]
  %s4 = inlined_call_operand.vmem [shape: f32[32,128], index: 4, kind: output, shape index: {}]
  %s5 = sld [smem:[#allocation0]]
  $region30: #{resblock_pallas.1} parent=0
    _
  %s7 = ssub.s32 1, %s5
  %s8 = scalar_select 0, %s7, %s5
  $region1: #{resblock_pallas.1} parent=0
    #allocation2 [shape = 'u8[98304]{0}', space=vmem, size = 0x18000, scoped, tag = 'input window, operand 1, single buffered']
    #allocation3 [shape = 's32[1]{0}', space=sflag, size = 0x4, scoped, tag = 'scoped memory for resblock_pallas.1']
    %9 = vsyncpa [#allocation3], 0
    // Predicated region
    $region2: #{resblock_pallas.1} parent=1 // pred_check
      _
    $region3: #{resblock_pallas.1} parent=1 // pred_check_branch
      %11 = sbr.rel (0) target = $region5
    $region4: #{resblock_pallas.1} parent=1 // pred_region
      _
    $region5: #{resblock_pallas.1} parent=1 // pred_fallthru
      _
    // Predicated region
    $region6: #{resblock_pallas.1} parent=1 // pred_check
      _
    $region7: #{resblock_pallas.1} parent=1 // pred_check_branch
      %13 = sbr.rel (0) target = $region9
    $region8: #{resblock_pallas.1} parent=1 // pred_region
      %s15 = ssub.s32 3072, 3072
      %16 = vsyncadd [#allocation3], %s15
      %s17 = sshll.u32 [#allocation2], 4
      %s18 = int_to_ptr.vmem [resolvable:$true] %s17
      %23 = dma.hbm_to_vmem [thread:$0]  %s1, 3072, %s18, [#allocation3], 128, 128, 8
    $region9: #{resblock_pallas.1} parent=1 // pred_fallthru
      _
    // Predicated region
    $region10: #{resblock_pallas.1} parent=1 // pred_check
      _
    $region11: #{resblock_pallas.1} parent=1 // pred_check_branch
      %25 = sbr.rel (0) target = $region13
    $region12: #{resblock_pallas.1} parent=1 // pred_region
      _
    $region13: #{resblock_pallas.1} parent=1 // pred_fallthru
      _
    // Predicated region
    $region14: #{resblock_pallas.1} parent=1 // pred_check
      _
    $region15: #{resblock_pallas.1} parent=1 // pred_check_branch
      %27 = sbr.rel (0) target = $region17
    $region16: #{resblock_pallas.1} parent=1 // pred_region
      _
    $region17: #{resblock_pallas.1} parent=1 // pred_fallthru
      _
    // Predicated region
    $region18: #{resblock_pallas.1} parent=1 // pred_check
      _
    $region19: #{resblock_pallas.1} parent=1 // pred_check_branch
      %29 = sbr.rel (0) target = $region21
    $region20: #{resblock_pallas.1} parent=1 // pred_region
      %30 = dma.done [#allocation3], 3072
    $region21: #{resblock_pallas.1} parent=1 // pred_fallthru
      _
    %v31 = vlaneseq
    %v32 = vshrl.u32 %v31, 7
    %v33 = vadd.s32 %v32, 8
    %v34 = vadd.s32 %v32, 16
    %v35 = vadd.s32 %v32, 24
    %vm36 = vcmp.lt.s32.totalorder %v32, 0
    %v37 = vsub.s32 0, %v32
    %v38 = vsel %vm36, %v37, %v32
    %v39 = vshrl.u32 %v38, 4
    %v40 = vand.u32 %v38, 15
    %v41 = vsub.s32 0, %v40
    %v42 = vsel %vm36, %v41, %v40
    %vm43 = vcmp.lt.s32.totalorder %v33, 0
    %v44 = vsub.s32 0, %v33
    %v45 = vsel %vm43, %v44, %v33
    %v46 = vshrl.u32 %v45, 4
    %v47 = vand.u32 %v45, 15
    %v48 = vsub.s32 0, %v47
    %v49 = vsel %vm43, %v48, %v47
    %vm50 = vcmp.lt.s32.totalorder %v34, 0
    %v51 = vsub.s32 0, %v34
    %v52 = vsel %vm50, %v51, %v34
    %v53 = vshrl.u32 %v52, 4
    %v54 = vand.u32 %v52, 15
    %v55 = vsub.s32 0, %v54
    %v56 = vsel %vm50, %v55, %v54
    %vm57 = vcmp.lt.s32.totalorder %v35, 0
    %v58 = vsub.s32 0, %v35
    %v59 = vsel %vm57, %v58, %v35
    %v60 = vshrl.u32 %v59, 4
    %v61 = vand.u32 %v59, 15
    %v62 = vsub.s32 0, %v61
    %v63 = vsel %vm57, %v62, %v61
    %vm64 = vcmp.ne.s32.totalorder %v42, 0
    %vm65 = vcmp.ne.s32.totalorder %v49, 0
    %vm66 = vcmp.ne.s32.totalorder %v56, 0
    %vm67 = vcmp.ne.s32.totalorder %v63, 0
    %vm68 = vcmp.lt.s32.totalorder %v42, 0
    %vm69 = vcmp.lt.s32.totalorder %v49, 0
    %vm70 = vcmp.lt.s32.totalorder %v56, 0
    %vm71 = vcmp.lt.s32.totalorder %v63, 0
    %vm72 = vmand %vm68, %vm64
    %vm73 = vmand %vm69, %vm65
    %vm74 = vmand %vm70, %vm66
    %vm75 = vmand %vm71, %vm67
    %v76 = vadd.s32 %v42, 16
    %v77 = vadd.s32 %v49, 16
    %v78 = vadd.s32 %v56, 16
    %v79 = vadd.s32 %v63, 16
    %v80 = vsel %vm72, %v76, %v42
    %v81 = vsel %vm73, %v77, %v49
    %v82 = vsel %vm74, %v78, %v56
    %v83 = vsel %vm75, %v79, %v63
    %vm84 = vcmp.eq.s32.totalorder %v80, 0
    %vm85 = vcmp.eq.s32.totalorder %v81, 0
    %vm86 = vcmp.eq.s32.totalorder %v82, 0
    %vm87 = vcmp.eq.s32.totalorder %v83, 0
    %vm88 = vcmp.eq.s32.totalorder %v80, 15
    %vm89 = vcmp.eq.s32.totalorder %v81, 15
    %vm90 = vcmp.eq.s32.totalorder %v82, 15
    %vm91 = vcmp.eq.s32.totalorder %v83, 15
    %v92 = vld [vmem:[%s0] sm:$0xff]
    %v93 = vld [vmem:[%s0 + $0x8] sm:$0xff]
    %v94 = vld [vmem:[%s0 + $0x10] sm:$0xff]
    %v95 = vld [vmem:[%s0 + $0x18] sm:$0xff]
    %v96 = vld [vmem:[%s3] sm:$0x3f]
    %v97 = vrot.slane %v92, 7
    %v98 = vrot.slane %v93, 7
    %v99 = vrot.slane %v94, 7
    %v100 = vrot.slane %v95, 7
    %vm101 = vcmp.lt.s32.totalorder %v32, 1
    %v102 = vsel %vm101, %v99, %v100
    %v103 = vsel %vm101, %v98, %v99
    %v104 = vsel %vm101, %v97, %v98
    %v105 = vsel %vm101, %v100, %v97
    %v106 = vsel %vm84, 1, 0
    %v107 = vsel %vm85, 1, 0
    %v108 = vsel %vm86, 1, 0
    %v109 = vsel %vm87, 1, 0
    %vm110 = vcmp.eq.s32.totalorder %v106, 1
    %vm111 = vcmp.eq.s32.totalorder %v107, 1
    %vm112 = vcmp.eq.s32.totalorder %v108, 1
    %vm113 = vcmp.eq.s32.totalorder %v109, 1
    %v114 = vsel %vm110, 0.0, %v105
    %v115 = vsel %vm111, 0.0, %v104
    %v116 = vsel %vm112, 0.0, %v103
    %v117 = vsel %vm113, 0.0, %v102
    %v118 = vrot.slane %v92, 1
    %v119 = vrot.slane %v93, 1
    %v120 = vrot.slane %v94, 1
    %v121 = vrot.slane %v95, 1
    %vm122 = vcmp.lt.s32.totalorder %v32, 7
    %v123 = vsel %vm122, %v120, %v121
    %v124 = vsel %vm122, %v119, %v120
    %v125 = vsel %vm122, %v118, %v119
    %v126 = vsel %vm122, %v121, %v118
    %v127 = vsel %vm88, 1, 0
    %v128 = vsel %vm89, 1, 0
    %v129 = vsel %vm90, 1, 0
    %v130 = vsel %vm91, 1, 0
    %vm131 = vcmp.eq.s32.totalorder %v127, 1
    %vm132 = vcmp.eq.s32.totalorder %v128, 1
    %vm133 = vcmp.eq.s32.totalorder %v129, 1
    %vm134 = vcmp.eq.s32.totalorder %v130, 1
    %v135 = vsel %vm131, 0.0, %v125
    %v136 = vsel %vm132, 0.0, %v124
    %v137 = vsel %vm133, 0.0, %v123
    %v138 = vsel %vm134, 0.0, %v126
    %143 = vrot.lane.b32.xlu0 %v92, 64
    %v144 = vpop.permute.xlu0 %143
    %145 = vrot.lane.b32.xlu0 %v93, 64
    %v146 = vpop.permute.xlu0 %145
    %147 = vrot.lane.b32.xlu0 %v94, 64
    %v148 = vpop.permute.xlu0 %147
    %149 = vrot.lane.b32.xlu0 %v95, 64
    %v150 = vpop.permute.xlu0 %149
    %vm155 = vcmask 523264
    %v156 = vsel %vm155, %v114, %v144
    %v157 = vsel %vm155, %v115, %v146
    %v158 = vsel %vm155, %v116, %v148
    %v159 = vsel %vm155, %v117, %v150
    %v160 = vld [vmem:[#allocation2] sm:$0xff]
    %v161 = vld [vmem:[#allocation2 + $0x8] sm:$0xff]
    %v162 = vld [vmem:[#allocation2 + $0x10] sm:$0xff]
    %v163 = vld [vmem:[#allocation2 + $0x18] sm:$0xff]
    %v164 = vld [vmem:[#allocation2 + $0x20] sm:$0xff]
    %v165 = vld [vmem:[#allocation2 + $0x28] sm:$0xff]
    %v166 = vld [vmem:[#allocation2 + $0x30] sm:$0xff]
    %v167 = vld [vmem:[#allocation2 + $0x38] sm:$0xff]
    %v168 = vld [vmem:[#allocation2 + $0x40] sm:$0xff]
    %v169 = vld [vmem:[#allocation2 + $0x48] sm:$0xff]
    %v170 = vld [vmem:[#allocation2 + $0x50] sm:$0xff]
    %v171 = vld [vmem:[#allocation2 + $0x58] sm:$0xff]
    %v172 = vld [vmem:[#allocation2 + $0x60] sm:$0xff]
    %v173 = vld [vmem:[#allocation2 + $0x68] sm:$0xff]
    %v174 = vld [vmem:[#allocation2 + $0x70] sm:$0xff]
    %v175 = vld [vmem:[#allocation2 + $0x78] sm:$0xff]
    %v176 = vld [vmem:[#allocation2 + $0x80] sm:$0xff]
    %v177 = vld [vmem:[#allocation2 + $0x88] sm:$0xff]
    %v178 = vld [vmem:[#allocation2 + $0x90] sm:$0xff]
    %v179 = vld [vmem:[#allocation2 + $0x98] sm:$0xff]
    %v180 = vld [vmem:[#allocation2 + $0xa0] sm:$0xff]
    %v181 = vld [vmem:[#allocation2 + $0xa8] sm:$0xff]
    %v182 = vld [vmem:[#allocation2 + $0xb0] sm:$0xff]
    %v183 = vld [vmem:[#allocation2 + $0xb8] sm:$0xff]
    %v184 = vlaneseq
    %v185 = vshrl.u32 %v184, 7
    %v186 = vsub.s32 0, %v185
    %v187 = vrot.slane %v96, %v186
    %v189 = vsel %vm155, %v135, 0
    %v192 = vsel %vm155, %v136, 0
    %v195 = vsel %vm155, %v137, 0
    %v198 = vsel %vm155, %v138, 0
    %200 = vmatprep.subr.mxu0 0.0
    %201 = vmatpush1.msra.mxu0 %v160
    %202 = vmatprep.subr.mxu0 0.0
    %203 = vmatpush1.msra.mxu0 %v161
    %204 = vmatprep.subr.mxu0 0.0
    %205 = vmatpush1.msra.mxu0 %v162
    %206 = vmatprep.subr.mxu0 0.0
    %207 = vmatpush1.msra.mxu0 %v163
    %208 = vmatprep.subr.mxu0 0.0
    %209 = vmatpush1.msra.mxu0 %v164
    %210 = vmatprep.subr.mxu0 0.0
    %211 = vmatpush1.msra.mxu0 %v165
    %212 = vmatprep.subr.mxu0 0.0
    %213 = vmatpush1.msra.mxu0 %v166
    %214 = vmatprep.subr.mxu0 0.0
    %215 = vmatpush1.msra.mxu0 %v167
    %216 = vmatprep.subr.mxu0 0.0
    %217 = vmatpush1.msra.mxu0 %v168
    %218 = vmatprep.subr.mxu0 0.0
    %219 = vmatpush1.msra.mxu0 %v169
    %220 = vmatprep.subr.mxu0 0.0
    %221 = vmatpush1.msra.mxu0 %v170
    %222 = vmatprep.subr.mxu0 0.0
    %223 = vmatpush1.msra.mxu0 %v171
    %224 = vmatprep.subr.mxu0 0.0
    %225 = vmatpush1.msra.mxu0 %v172
    %226 = vmatprep.subr.mxu0 0.0
    %227 = vmatpush1.msra.mxu0 %v173
    %228 = vmatprep.subr.mxu0 0.0
    %229 = vmatpush1.msra.mxu0 %v174
    %230 = vmatprep.subr.mxu0 0.0
    %231 = vmatpush1.msra.mxu0 %v175
    %232 = vmatprep.subr.mxu0 0.0
    %233 = vmatpush1.msra.mxu0 %v176
    %234 = vmatprep.subr.mxu0 0.0
    %235 = vmatpush1.msra.mxu0 %v177
    %236 = vmatprep.subr.mxu0 0.0
    %237 = vmatpush1.msra.mxu0 %v178
    %238 = vmatprep.subr.mxu0 0.0
    %239 = vmatpush1.msra.mxu0 %v179
    %240 = vmatprep.subr.mxu0 0.0
    %241 = vmatpush1.msra.mxu0 %v180
    %242 = vmatprep.subr.mxu0 0.0
    %243 = vmatpush1.msra.mxu0 %v181
    %244 = vmatprep.subr.mxu0 0.0
    %245 = vmatpush1.msra.mxu0 %v182
    %246 = vmatprep.subr.mxu0 0.0
    %247 = vmatpush1.msra.mxu0 %v183
    %248 = vmatprep.subr.mxu0 0.0
    %249 = vmatpush1.msra.mxu0 0.0
    %250 = vmatprep.subr.mxu0 0.0
    %251 = vmatpush1.msra.mxu0 0.0
    %252 = vmatprep.subr.mxu0 0.0
    %253 = vmatpush1.msra.mxu0 0.0
    %254 = vmatprep.subr.mxu0 0.0
    %255 = vmatpush1.msra.mxu0 0.0
    %256 = vmatprep.subr.mxu0 0.0
    %257 = vmatpush1.msra.mxu0 0.0
    %258 = vmatprep.subr.mxu0 0.0
    %259 = vmatpush1.msra.mxu0 0.0
    %260 = vmatprep.subr.mxu0 0.0
    %261 = vmatpush1.msra.mxu0 0.0
    %262 = vmatprep.subr.mxu0 0.0
    %263 = vmatpush1.msra.mxu0 0.0
    %264 = vmatprep.mubr.f32.mxu0 %v189
    %265 = vmatmul.mubr.f32.gmra.mrb[0].mxu0 %v156
    %v266 = vpop.f32.mrb[0].mxu0
    %v267 = vadd.f32 %v187, %v266
    %v268 = vpop.f32.mrb[0].mxu0
    %269 = vmatprep.mubr.f32.mxu0 %v192
    %270 = vmatmul.mubr.f32.gmra.mrb[0].mxu0 %v157
    %v271 = vpop.f32.mrb[0].mxu0
    %v272 = vadd.f32 %v187, %v271
    %v273 = vpop.f32.mrb[0].mxu0
    %274 = vmatprep.mubr.f32.mxu0 %v195
    %275 = vmatmul.mubr.f32.gmra.mrb[0].mxu0 %v158
    %v276 = vpop.f32.mrb[0].mxu0
    %v277 = vadd.f32 %v187, %v276
    %v278 = vpop.f32.mrb[0].mxu0
    %279 = vmatprep.mubr.f32.mxu0 %v198
    %280 = vmatmul.mubr.f32.gmra.mrb[0].mxu0 %v159
    %v281 = vpop.f32.mrb[0].mxu0
    %v282 = vadd.f32 %v187, %v281
    %v283 = vpop.f32.mrb[0].mxu0
    %284 = vdwg.mxu0
    %v285 = vadd.f32 %v267, %v272
    %v286 = vadd.f32 %v285, %v277
    %v287 = vadd.f32 %v286, %v282
    %v288 = vrot.slane %v287, 4
    %v289 = vadd.f32 %v287, %v288
    %v290 = vrot.slane %v289, 2
    %v291 = vadd.f32 %v289, %v290
    %v292 = vrot.slane %v291, 1
    %v293 = vadd.f32 %v291, %v292
    %294 = vrot.lane.b32.xlu0 %v293, 8
    %v295 = vpop.permute.xlu0 %294
    %v296 = vadd.f32 %v293, %v295
    %297 = vrot.lane.b32.xlu0 %v296, 16
    %v298 = vpop.permute.xlu0 %297
    %v299 = vadd.f32 %v296, %v298
    %300 = vrot.lane.b32.xlu0 %v299, 32
    %v301 = vpop.permute.xlu0 %300
    %v302 = vadd.f32 %v299, %v301
    %303 = vrot.lane.b32.xlu0 %v302, 64
    %v304 = vpop.permute.xlu0 %303
    %v305 = vadd.f32 %v302, %v304
    %v306 = vmul.f32 %v305, 0.001953125
    %v307 = vmul.f32 %v267, %v267
    %v308 = vmul.f32 %v272, %v272
    %v309 = vmul.f32 %v277, %v277
    %v310 = vmul.f32 %v282, %v282
    %v311 = vadd.f32 %v307, %v308
    %v312 = vadd.f32 %v311, %v309
    %v313 = vadd.f32 %v312, %v310
    %v314 = vrot.slane %v313, 4
    %v315 = vadd.f32 %v313, %v314
    %v316 = vrot.slane %v315, 2
    %v317 = vadd.f32 %v315, %v316
    %v318 = vrot.slane %v317, 1
    %v319 = vadd.f32 %v317, %v318
    %320 = vrot.lane.b32.xlu0 %v319, 8
    %v321 = vpop.permute.xlu0 %320
    %v322 = vadd.f32 %v319, %v321
    %323 = vrot.lane.b32.xlu0 %v322, 16
    %v324 = vpop.permute.xlu0 %323
    %v325 = vadd.f32 %v322, %v324
    %326 = vrot.lane.b32.xlu0 %v325, 32
    %v327 = vpop.permute.xlu0 %326
    %v328 = vadd.f32 %v325, %v327
    %329 = vrot.lane.b32.xlu0 %v328, 64
    %v330 = vpop.permute.xlu0 %329
    %v331 = vadd.f32 %v328, %v330
    %v332 = vmul.f32 %v331, 0.001953125
    %v333 = vmul.f32 %v306, %v306
    %v334 = vsub.f32 %v332, %v333
    %v335 = vadd.f32 %v334, 1e-05
    %v336 = vrsqrt.pop %v335
    %v338 = vrot.slane %v96, 1
    %v340 = vmul.f32 %v336, %v338
    %v341 = vlaneseq
    %v342 = vshrl.u32 %v341, 7
    %v343 = vsub.s32 0, %v342
    %v344 = vrot.slane %v306, %v343
    %v345 = vsub.f32 %v267, %v344
    %v346 = vsub.f32 %v272, %v344
    %v347 = vsub.f32 %v277, %v344
    %v348 = vsub.f32 %v282, %v344
    %v349 = vlaneseq
    %v350 = vshrl.u32 %v349, 7
    %v351 = vsub.s32 0, %v350
    %v352 = vrot.slane %v340, %v351
    %v353 = vmul.f32 %v345, %v352
    %v354 = vmul.f32 %v346, %v352
    %v355 = vmul.f32 %v347, %v352
    %v356 = vmul.f32 %v348, %v352
    %v357 = vlaneseq
    %v358 = vshrl.u32 %v357, 7
    %v359 = vsub.s32 2, %v358
    %v360 = vrot.slane %v96, %v359
    %v361 = vadd.f32 %v353, %v360
    %v362 = vadd.f32 %v354, %v360
    %v363 = vadd.f32 %v355, %v360
    %v364 = vadd.f32 %v356, %v360
    %vm365 = vcmp.gt.f32.partialorder %v361, 0.0
    %vm366 = vcmp.gt.f32.partialorder %v362, 0.0
    %vm367 = vcmp.gt.f32.partialorder %v363, 0.0
    %vm368 = vcmp.gt.f32.partialorder %v364, 0.0
    %v369 = vmul.f32 %v361, 0.01
    %v370 = vmul.f32 %v362, 0.01
    %v371 = vmul.f32 %v363, 0.01
    %v372 = vmul.f32 %v364, 0.01
    %v373 = vsel %vm365, %v361, %v369
    %v374 = vsel %vm366, %v362, %v370
    %v375 = vsel %vm367, %v363, %v371
    %v376 = vsel %vm368, %v364, %v372
    %v377 = vrot.slane %v373, 7
    %v378 = vrot.slane %v374, 7
    %v379 = vrot.slane %v375, 7
    %v380 = vrot.slane %v376, 7
    %v381 = vsel %vm101, %v379, %v380
    %v382 = vsel %vm101, %v378, %v379
    %v383 = vsel %vm101, %v377, %v378
    %v384 = vsel %vm101, %v380, %v377
    %v385 = vsel %vm110, 0.0, %v384
    %v386 = vsel %vm111, 0.0, %v383
    %v387 = vsel %vm112, 0.0, %v382
    %v388 = vsel %vm113, 0.0, %v381
    %v389 = vrot.slane %v373, 1
    %v390 = vrot.slane %v374, 1
    %v391 = vrot.slane %v375, 1
    %v392 = vrot.slane %v376, 1
    %v393 = vsel %vm122, %v391, %v392
    %v394 = vsel %vm122, %v390, %v391
    %v395 = vsel %vm122, %v389, %v390
    %v396 = vsel %vm122, %v392, %v389
    %v397 = vsel %vm131, 0.0, %v395
    %v398 = vsel %vm132, 0.0, %v394
    %v399 = vsel %vm133, 0.0, %v393
    %v400 = vsel %vm134, 0.0, %v396
    %v401 = vld [vmem:[%s2] sm:$0xff]
    %v402 = vld [vmem:[%s2 + $0x8] sm:$0xff]
    %v403 = vld [vmem:[%s2 + $0x10] sm:$0xff]
    %v404 = vld [vmem:[%s2 + $0x18] sm:$0xff]
    %v405 = vld [vmem:[%s2 + $0x20] sm:$0xff]
    %v406 = vld [vmem:[%s2 + $0x28] sm:$0xff]
    %v407 = vld [vmem:[%s2 + $0x30] sm:$0xff]
    %v408 = vld [vmem:[%s2 + $0x38] sm:$0xff]
    %v409 = vld [vmem:[%s2 + $0x40] sm:$0xff]
    %v410 = vld [vmem:[%s2 + $0x48] sm:$0xff]
    %v411 = vld [vmem:[%s2 + $0x50] sm:$0xff]
    %v412 = vld [vmem:[%s2 + $0x58] sm:$0xff]
    %v413 = vld [vmem:[%s2 + $0x60] sm:$0xff]
    %v414 = vld [vmem:[%s2 + $0x68] sm:$0xff]
    %v415 = vld [vmem:[%s2 + $0x70] sm:$0xff]
    %v416 = vld [vmem:[%s2 + $0x78] sm:$0xff]
    %v417 = vld [vmem:[%s2 + $0x80] sm:$0xff]
    %v418 = vld [vmem:[%s2 + $0x88] sm:$0xff]
    %v419 = vld [vmem:[%s2 + $0x90] sm:$0xff]
    %v420 = vld [vmem:[%s2 + $0x98] sm:$0xff]
    %v421 = vld [vmem:[%s2 + $0xa0] sm:$0xff]
    %v422 = vld [vmem:[%s2 + $0xa8] sm:$0xff]
    %v423 = vld [vmem:[%s2 + $0xb0] sm:$0xff]
    %v424 = vld [vmem:[%s2 + $0xb8] sm:$0xff]
    %v425 = vld [vmem:[%s2 + $0xc0] sm:$0xff]
    %v426 = vld [vmem:[%s2 + $0xc8] sm:$0xff]
    %v427 = vld [vmem:[%s2 + $0xd0] sm:$0xff]
    %v428 = vld [vmem:[%s2 + $0xd8] sm:$0xff]
    %v429 = vld [vmem:[%s2 + $0xe0] sm:$0xff]
    %v430 = vld [vmem:[%s2 + $0xe8] sm:$0xff]
    %v431 = vld [vmem:[%s2 + $0xf0] sm:$0xff]
    %v432 = vld [vmem:[%s2 + $0xf8] sm:$0xff]
    %v433 = vld [vmem:[%s2 + $0x100] sm:$0xff]
    %v434 = vld [vmem:[%s2 + $0x108] sm:$0xff]
    %v435 = vld [vmem:[%s2 + $0x110] sm:$0xff]
    %v436 = vld [vmem:[%s2 + $0x118] sm:$0xff]
    %v437 = vld [vmem:[%s2 + $0x120] sm:$0xff]
    %v438 = vld [vmem:[%s2 + $0x128] sm:$0xff]
    %v439 = vld [vmem:[%s2 + $0x130] sm:$0xff]
    %v440 = vld [vmem:[%s2 + $0x138] sm:$0xff]
    %v441 = vld [vmem:[%s2 + $0x140] sm:$0xff]
    %v442 = vld [vmem:[%s2 + $0x148] sm:$0xff]
    %v443 = vld [vmem:[%s2 + $0x150] sm:$0xff]
    %v444 = vld [vmem:[%s2 + $0x158] sm:$0xff]
    %v445 = vld [vmem:[%s2 + $0x160] sm:$0xff]
    %v446 = vld [vmem:[%s2 + $0x168] sm:$0xff]
    %v447 = vld [vmem:[%s2 + $0x170] sm:$0xff]
    %v448 = vld [vmem:[%s2 + $0x178] sm:$0xff]
    %v449 = vld [vmem:[%s2 + $0x180] sm:$0xff]
    %v450 = vld [vmem:[%s2 + $0x188] sm:$0xff]
    %v451 = vld [vmem:[%s2 + $0x190] sm:$0xff]
    %v452 = vld [vmem:[%s2 + $0x198] sm:$0xff]
    %v453 = vld [vmem:[%s2 + $0x1a0] sm:$0xff]
    %v454 = vld [vmem:[%s2 + $0x1a8] sm:$0xff]
    %v455 = vld [vmem:[%s2 + $0x1b0] sm:$0xff]
    %v456 = vld [vmem:[%s2 + $0x1b8] sm:$0xff]
    %v457 = vlaneseq
    %v458 = vshrl.u32 %v457, 7
    %v459 = vsub.s32 3, %v458
    %v460 = vrot.slane %v96, %v459
    %v461 = vsel %vm155, %v92, 0
    %v463 = vsel %vm155, %v93, 0
    %v465 = vsel %vm155, %v94, 0
    %v467 = vsel %vm155, %v95, 0
    %469 = vmatprep.subr.mxu0 0.0
    %470 = vmatpush1.msra.mxu0 %v401
    %471 = vmatprep.subr.mxu0 0.0
    %472 = vmatpush1.msra.mxu0 %v402
    %473 = vmatprep.subr.mxu0 0.0
    %474 = vmatpush1.msra.mxu0 %v403
    %475 = vmatprep.subr.mxu0 0.0
    %476 = vmatpush1.msra.mxu0 %v404
    %477 = vmatprep.subr.mxu0 0.0
    %478 = vmatpush1.msra.mxu0 %v405
    %479 = vmatprep.subr.mxu0 0.0
    %480 = vmatpush1.msra.mxu0 %v406
    %481 = vmatprep.subr.mxu0 0.0
    %482 = vmatpush1.msra.mxu0 %v407
    %483 = vmatprep.subr.mxu0 0.0
    %484 = vmatpush1.msra.mxu0 %v408
    %485 = vmatprep.subr.mxu0 0.0
    %486 = vmatpush1.msra.mxu0 %v409
    %487 = vmatprep.subr.mxu0 0.0
    %488 = vmatpush1.msra.mxu0 %v410
    %489 = vmatprep.subr.mxu0 0.0
    %490 = vmatpush1.msra.mxu0 %v411
    %491 = vmatprep.subr.mxu0 0.0
    %492 = vmatpush1.msra.mxu0 %v412
    %493 = vmatprep.subr.mxu0 0.0
    %494 = vmatpush1.msra.mxu0 %v413
    %495 = vmatprep.subr.mxu0 0.0
    %496 = vmatpush1.msra.mxu0 %v414
    %497 = vmatprep.subr.mxu0 0.0
    %498 = vmatpush1.msra.mxu0 %v415
    %499 = vmatprep.subr.mxu0 0.0
    %500 = vmatpush1.msra.mxu0 %v416
    %501 = vmatprep.subr.mxu0 0.0
    %502 = vmatpush1.msra.mxu0 %v417
    %503 = vmatprep.subr.mxu0 0.0
    %504 = vmatpush1.msra.mxu0 %v418
    %505 = vmatprep.subr.mxu0 0.0
    %506 = vmatpush1.msra.mxu0 %v419
    %507 = vmatprep.subr.mxu0 0.0
    %508 = vmatpush1.msra.mxu0 %v420
    %509 = vmatprep.subr.mxu0 0.0
    %510 = vmatpush1.msra.mxu0 %v421
    %511 = vmatprep.subr.mxu0 0.0
    %512 = vmatpush1.msra.mxu0 %v422
    %513 = vmatprep.subr.mxu0 0.0
    %514 = vmatpush1.msra.mxu0 %v423
    %515 = vmatprep.subr.mxu0 0.0
    %516 = vmatpush1.msra.mxu0 %v424
    %517 = vmatprep.subr.mxu0 0.0
    %518 = vmatpush1.msra.mxu0 %v425
    %519 = vmatprep.subr.mxu0 0.0
    %520 = vmatpush1.msra.mxu0 %v426
    %521 = vmatprep.subr.mxu0 0.0
    %522 = vmatpush1.msra.mxu0 %v427
    %523 = vmatprep.subr.mxu0 0.0
    %524 = vmatpush1.msra.mxu0 %v428
    %525 = vmatprep.subr.mxu0 0.0
    %526 = vmatpush1.msra.mxu0 %v429
    %527 = vmatprep.subr.mxu0 0.0
    %528 = vmatpush1.msra.mxu0 %v430
    %529 = vmatprep.subr.mxu0 0.0
    %530 = vmatpush1.msra.mxu0 %v431
    %531 = vmatprep.subr.mxu0 0.0
    %532 = vmatpush1.msra.mxu0 %v432
    %533 = vmatprep.mubr.f32.mxu0 %v373
    %534 = vmatmul.mubr.f32.gmra.mrb[0].mxu0 %v385
    %v535 = vpop.f32.mrb[0].mxu0
    %v536 = vadd.f32 %v460, %v535
    %v537 = vpop.f32.mrb[0].mxu0
    %538 = vmatprep.mubr.f32.mxu0 %v374
    %539 = vmatmul.mubr.f32.gmra.mrb[0].mxu0 %v386
    %v540 = vpop.f32.mrb[0].mxu0
    %v541 = vadd.f32 %v460, %v540
    %v542 = vpop.f32.mrb[0].mxu0
    %543 = vmatprep.mubr.f32.mxu0 %v375
    %544 = vmatmul.mubr.f32.gmra.mrb[0].mxu0 %v387
    %v545 = vpop.f32.mrb[0].mxu0
    %v546 = vadd.f32 %v460, %v545
    %v547 = vpop.f32.mrb[0].mxu0
    %548 = vmatprep.mubr.f32.mxu0 %v376
    %549 = vmatmul.mubr.f32.gmra.mrb[0].mxu0 %v388
    %v550 = vpop.f32.mrb[0].mxu0
    %v551 = vadd.f32 %v460, %v550
    %v552 = vpop.f32.mrb[0].mxu0
    %553 = vdwg.mxu0
    %554 = vmatprep.subr.mxu0 0.0
    %555 = vmatpush1.msra.mxu0 %v433
    %556 = vmatprep.subr.mxu0 0.0
    %557 = vmatpush1.msra.mxu0 %v434
    %558 = vmatprep.subr.mxu0 0.0
    %559 = vmatpush1.msra.mxu0 %v435
    %560 = vmatprep.subr.mxu0 0.0
    %561 = vmatpush1.msra.mxu0 %v436
    %562 = vmatprep.subr.mxu0 0.0
    %563 = vmatpush1.msra.mxu0 %v437
    %564 = vmatprep.subr.mxu0 0.0
    %565 = vmatpush1.msra.mxu0 %v438
    %566 = vmatprep.subr.mxu0 0.0
    %567 = vmatpush1.msra.mxu0 %v439
    %568 = vmatprep.subr.mxu0 0.0
    %569 = vmatpush1.msra.mxu0 %v440
    %570 = vmatprep.subr.mxu0 0.0
    %571 = vmatpush1.msra.mxu0 %v441
    %572 = vmatprep.subr.mxu0 0.0
    %573 = vmatpush1.msra.mxu0 %v442
    %574 = vmatprep.subr.mxu0 0.0
    %575 = vmatpush1.msra.mxu0 %v443
    %576 = vmatprep.subr.mxu0 0.0
    %577 = vmatpush1.msra.mxu0 %v444
    %578 = vmatprep.subr.mxu0 0.0
    %579 = vmatpush1.msra.mxu0 %v445
    %580 = vmatprep.subr.mxu0 0.0
    %581 = vmatpush1.msra.mxu0 %v446
    %582 = vmatprep.subr.mxu0 0.0
    %583 = vmatpush1.msra.mxu0 %v447
    %584 = vmatprep.subr.mxu0 0.0
    %585 = vmatpush1.msra.mxu0 %v448
    %586 = vmatprep.subr.mxu0 0.0
    %587 = vmatpush1.msra.mxu0 %v449
    %588 = vmatprep.subr.mxu0 0.0
    %589 = vmatpush1.msra.mxu0 %v450
    %590 = vmatprep.subr.mxu0 0.0
    %591 = vmatpush1.msra.mxu0 %v451
    %592 = vmatprep.subr.mxu0 0.0
    %593 = vmatpush1.msra.mxu0 %v452
    %594 = vmatprep.subr.mxu0 0.0
    %595 = vmatpush1.msra.mxu0 %v453
    %596 = vmatprep.subr.mxu0 0.0
    %597 = vmatpush1.msra.mxu0 %v454
    %598 = vmatprep.subr.mxu0 0.0
    %599 = vmatpush1.msra.mxu0 %v455
    %600 = vmatprep.subr.mxu0 0.0
    %601 = vmatpush1.msra.mxu0 %v456
    %602 = vmatprep.subr.mxu0 0.0
    %603 = vmatpush1.msra.mxu0 0.0
    %604 = vmatprep.subr.mxu0 0.0
    %605 = vmatpush1.msra.mxu0 0.0
    %606 = vmatprep.subr.mxu0 0.0
    %607 = vmatpush1.msra.mxu0 0.0
    %608 = vmatprep.subr.mxu0 0.0
    %609 = vmatpush1.msra.mxu0 0.0
    %610 = vmatprep.subr.mxu0 0.0
    %611 = vmatpush1.msra.mxu0 0.0
    %612 = vmatprep.subr.mxu0 0.0
    %613 = vmatpush1.msra.mxu0 0.0
    %614 = vmatprep.subr.mxu0 0.0
    %615 = vmatpush1.msra.mxu0 0.0
    %616 = vmatprep.subr.mxu0 0.0
    %617 = vmatpush1.msra.mxu0 0.0
    %618 = vmatprep.mubr.f32.mxu0 %v461
    %619 = vmatmul.mubr.f32.gmra.mrb[0].mxu0 %v397
    %v620 = vpop.f32.mrb[0].mxu0
    %v621 = vadd.f32 %v536, %v620
    %v622 = vpop.f32.mrb[0].mxu0
    %623 = vmatprep.mubr.f32.mxu0 %v463
    %624 = vmatmul.mubr.f32.gmra.mrb[0].mxu0 %v398
    %v625 = vpop.f32.mrb[0].mxu0
    %v626 = vadd.f32 %v541, %v625
    %v627 = vpop.f32.mrb[0].mxu0
    %628 = vmatprep.mubr.f32.mxu0 %v465
    %629 = vmatmul.mubr.f32.gmra.mrb[0].mxu0 %v399
    %v630 = vpop.f32.mrb[0].mxu0
    %v631 = vadd.f32 %v546, %v630
    %v632 = vpop.f32.mrb[0].mxu0
    %633 = vmatprep.mubr.f32.mxu0 %v467
    %634 = vmatmul.mubr.f32.gmra.mrb[0].mxu0 %v400
    %v635 = vpop.f32.mrb[0].mxu0
    %v636 = vadd.f32 %v551, %v635
    %v637 = vpop.f32.mrb[0].mxu0
    %638 = vdwg.mxu0
    %vm639 = vcmp.gt.f32.partialorder %v621, 0.0
    %vm640 = vcmp.gt.f32.partialorder %v626, 0.0
    %vm641 = vcmp.gt.f32.partialorder %v631, 0.0
    %vm642 = vcmp.gt.f32.partialorder %v636, 0.0
    %v643 = vmul.f32 %v621, 0.01
    %v644 = vmul.f32 %v626, 0.01
    %v645 = vmul.f32 %v631, 0.01
    %v646 = vmul.f32 %v636, 0.01
    %v647 = vsel %vm639, %v621, %v643
    %v648 = vsel %vm640, %v626, %v644
    %v649 = vsel %vm641, %v631, %v645
    %v650 = vsel %vm642, %v636, %v646
    %v651 = vadd.f32 %v647, %v648
    %v652 = vadd.f32 %v651, %v649
    %v653 = vadd.f32 %v652, %v650
    %v654 = vrot.slane %v653, 4
    %v655 = vadd.f32 %v653, %v654
    %v656 = vrot.slane %v655, 2
    %v657 = vadd.f32 %v655, %v656
    %v658 = vrot.slane %v657, 1
    %v659 = vadd.f32 %v657, %v658
    %660 = vrot.lane.b32.xlu0 %v659, 8
    %v661 = vpop.permute.xlu0 %660
    %v662 = vadd.f32 %v659, %v661
    %663 = vrot.lane.b32.xlu0 %v662, 16
    %v664 = vpop.permute.xlu0 %663
    %v665 = vadd.f32 %v662, %v664
    %666 = vrot.lane.b32.xlu0 %v665, 32
    %v667 = vpop.permute.xlu0 %666
    %v668 = vadd.f32 %v665, %v667
    %669 = vrot.lane.b32.xlu0 %v668, 64
    %v670 = vpop.permute.xlu0 %669
    %v671 = vadd.f32 %v668, %v670
    %v672 = vmul.f32 %v671, 0.001953125
    %v673 = vmul.f32 %v647, %v647
    %v674 = vmul.f32 %v648, %v648
    %v675 = vmul.f32 %v649, %v649
    %v676 = vmul.f32 %v650, %v650
    %v677 = vadd.f32 %v673, %v674
    %v678 = vadd.f32 %v677, %v675
    %v679 = vadd.f32 %v678, %v676
    %v680 = vrot.slane %v679, 4
    %v681 = vadd.f32 %v679, %v680
    %v682 = vrot.slane %v681, 2
    %v683 = vadd.f32 %v681, %v682
    %v684 = vrot.slane %v683, 1
    %v685 = vadd.f32 %v683, %v684
    %686 = vrot.lane.b32.xlu0 %v685, 8
    %v687 = vpop.permute.xlu0 %686
    %v688 = vadd.f32 %v685, %v687
    %689 = vrot.lane.b32.xlu0 %v688, 16
    %v690 = vpop.permute.xlu0 %689
    %v691 = vadd.f32 %v688, %v690
    %692 = vrot.lane.b32.xlu0 %v691, 32
    %v693 = vpop.permute.xlu0 %692
    %v694 = vadd.f32 %v691, %v693
    %695 = vrot.lane.b32.xlu0 %v694, 64
    %v696 = vpop.permute.xlu0 %695
    %v697 = vadd.f32 %v694, %v696
    %v698 = vmul.f32 %v697, 0.001953125
    %v699 = vmul.f32 %v672, %v672
    %v700 = vsub.f32 %v698, %v699
    %v701 = vadd.f32 %v700, 1e-05
    %v702 = vrsqrt.pop %v701
    %v703 = vrot.slane %v96, 4
    %v705 = vmul.f32 %v702, %v703
    %v706 = vlaneseq
    %v707 = vshrl.u32 %v706, 7
    %v708 = vsub.s32 0, %v707
    %v709 = vrot.slane %v672, %v708
    %v710 = vsub.f32 %v647, %v709
    %v711 = vsub.f32 %v648, %v709
    %v712 = vsub.f32 %v649, %v709
    %v713 = vsub.f32 %v650, %v709
    %v714 = vlaneseq
    %v715 = vshrl.u32 %v714, 7
    %v716 = vsub.s32 0, %v715
    %v717 = vrot.slane %v705, %v716
    %v718 = vmul.f32 %v710, %v717
    %v719 = vmul.f32 %v711, %v717
    %v720 = vmul.f32 %v712, %v717
    %v721 = vmul.f32 %v713, %v717
    %v722 = vlaneseq
    %v723 = vshrl.u32 %v722, 7
    %v724 = vsub.s32 5, %v723
    %v725 = vrot.slane %v96, %v724
    %v726 = vadd.f32 %v718, %v725
    %v727 = vadd.f32 %v719, %v725
    %v728 = vadd.f32 %v720, %v725
    %v729 = vadd.f32 %v721, %v725
    %730 = vst [vmem:[%s4] sm:$0xff] %v726
    %731 = vst [vmem:[%s4 + $0x8] sm:$0xff] %v727
    %732 = vst [vmem:[%s4 + $0x10] sm:$0xff] %v728
    %733 = vst [vmem:[%s4 + $0x18] sm:$0xff] %v729
    // Predicated region
    $region22: #{resblock_pallas.1} parent=1 // pred_check
      _
    $region23: #{resblock_pallas.1} parent=1 // pred_check_branch
      %735 = sbr.rel (0) target = $region25
    $region24: #{resblock_pallas.1} parent=1 // pred_region
      _
    $region25: #{resblock_pallas.1} parent=1 // pred_fallthru
      _
    // Predicated region
    $region26: #{resblock_pallas.1} parent=1 // pred_check
      _
    $region27: #{resblock_pallas.1} parent=1 // pred_check_branch
      %737 = sbr.rel (0) target = $region29
    $region28: #{resblock_pallas.1} parent=1 // pred_region
      _
    $region29: #{resblock_pallas.1} parent=1 // pred_fallthru
      _
    %738 = vsyncpa [#allocation3], 1

</llo_original>
